<compile_context>
chip_gen: v6e
topology: v6e:2x2x1
jax: 0.10.0
libtpu: 0.0.40
codegen_flags: <defaults>
</compile_context>

<pallas_src>
import functools

import jax
import jax.numpy as jnp
from jax.experimental import pallas as pl
from jax.experimental.pallas import tpu as pltpu


def _round_up(x, m):
    return ((x + m - 1) // m) * m


def _default_num_splits():
    """Best-effort: 2 on chips with two TensorCores per device (v7x), else 1."""
    try:
        dev = jax.devices()[0]
        n = getattr(dev, "num_cores", None)
        if n and int(n) > 1:
            return min(2, int(n))
        kind = str(getattr(dev, "device_kind", "")).lower()
        if "v7" in kind:
            return 2
    except Exception:
        pass
    return 1


def _gce_kernel(logits_ref, lw_ref, out_ref, *, q, kq):
    # logits_ref: (TB, C) native dtype
    # lw_ref:     (TB, 2) float32 -- col 0: label (as float), col 1: weight
    # out_ref:    (1, 1, 1) float32 per-split running sum of (k^q - y_g^q) * w
    t = pl.program_id(1)

    @pl.when(t == 0)
    def _init():
        out_ref[...] = jnp.zeros_like(out_ref)

    x = logits_ref[...].astype(jnp.float32)                 # (TB, C)
    lab = lw_ref[:, 0:1].astype(jnp.int32)                  # (TB, 1) exact
    w = lw_ref[:, 1:2]                                       # (TB, 1)

    col = jax.lax.broadcasted_iota(jnp.int32, x.shape, 1)    # (TB, C)
    hit = col == lab                                          # (TB, C)

    # Only what the loss actually needs -- no full softmax materialized.
    m = jnp.max(x, axis=1, keepdims=True)                     # (TB, 1)
    x_lab = jnp.max(jnp.where(hit, x, -jnp.inf), axis=1, keepdims=True)
    denom = jnp.sum(jnp.exp(x - m), axis=1, keepdims=True)    # (TB, 1)

    # y_g**q = exp(q * (x_label - logsumexp(x)))  (exact, no divide / pow).
    # Out-of-range labels give x_lab = -inf -> y_gq = 0 (documented behavior).
    y_gq = jnp.exp(q * (x_lab - m - jnp.log(denom)))          # (TB, 1)

    # Per-row contribution (the 1/q and the final mean's 1/B are applied
    # once on the scalar result in the wrapper).
    loss_rows = (kq - y_gq) * w                               # (TB, 1)

    out_ref[0] += jnp.sum(loss_rows, axis=0, keepdims=True)   # (1, 1)


def gce_loss(logits, label_ids, sample_ids, weight, *, q=0.7, k=0.5,
             block_b=8192, num_splits=None,
             target_bytes=8 * 1024 * 1024,
             vmem_limit_bytes=48 * 1024 * 1024):
    """Forward pass of GCELoss.  Returns a scalar float32 loss."""
    B, C = logits.shape

    # glue: data-dependent per-sample pruning-weight gather (done in XLA),
    # then labels + weights packed into ONE (B, 2) f32 aux array so only a
    # single lane-padded auxiliary stream is DMA'd per tile.
    w = weight[sample_ids].reshape(B).astype(jnp.float32)
    labf = label_ids.reshape(B).astype(jnp.float32)          # exact for C < 2^24
    lw = jnp.stack([labf, w], axis=1)                        # (B, 2) float32

    # --- batch tile size: budget ~target_bytes of VMEM per pipeline buffer
    #     copy, computed on the LANE-PADDED footprint (so small C is sized
    #     correctly), rounded to the dtype packing granule / 128. ---
    itemsize = jnp.dtype(logits.dtype).itemsize
    granule = 8 * max(1, 4 // itemsize)          # f32: 8, bf16: 16, int8: 32
    logits_row_bytes = _round_up(C, 128) * itemsize
    aux_row_bytes = 128 * 4                      # (TB, 2) f32 pads to 128 lanes
    per_row_bytes = logits_row_bytes + aux_row_bytes
    rows = max(granule, int(target_bytes) // per_row_bytes)
    TB = min(rows, int(block_b), _round_up(B, granule))
    if TB >= 128:
        TB = (TB // 128) * 128
    TB = max(granule, (TB // granule) * granule)

    # --- grid: (num_splits "parallel", batch tiles "arbitrary") ---
    S = int(num_splits) if num_splits is not None else _default_num_splits()
    S = max(1, S)
    tiles = pl.cdiv(B, TB)
    S = min(S, tiles)
    tiles_per_split = pl.cdiv(tiles, S)
    Bp = S * tiles_per_split * TB

    if Bp != B:
        pad = Bp - B
        logits = jnp.pad(logits, ((0, pad), (0, 0)))
        lw = jnp.pad(lw, ((0, pad), (0, 0)))     # zero weight -> zero loss

    kernel = functools.partial(
        _gce_kernel, q=float(q), kq=float(k) ** float(q))

    batch_idx = lambda s, t: (s * tiles_per_split + t, 0)

    partial_sums = pl.pallas_call(
        kernel,
        out_shape=jax.ShapeDtypeStruct((S, 1, 1), jnp.float32),
        grid=(S, tiles_per_split),
        in_specs=[
            pl.BlockSpec((TB, C), batch_idx),    # logits tile (native dtype)
            pl.BlockSpec((TB, 2), batch_idx),    # packed [label, weight] tile
        ],
        out_specs=pl.BlockSpec((1, 1, 1), lambda s, t: (s, 0, 0)),
        compiler_params=pltpu.CompilerParams(
            dimension_semantics=("parallel", "arbitrary"),
            vmem_limit_bytes=int(vmem_limit_bytes)),
    )(logits, lw)

    # combine per-split partial sums; fold in 1/q and divide by the TRUE B.
    return jnp.sum(partial_sums) / (float(q) * B)


def gce_loss_ref(logits, label_ids, sample_ids, weight, *, q=0.7, k=0.5):
    """Pure-JAX reference mirroring the PyTorch forward."""
    p = jax.nn.softmax(logits.astype(jnp.float32), axis=1)
    y_g = jnp.take_along_axis(p, label_ids[:, None], axis=1)   # (B, 1)
    w = weight[sample_ids]                                     # (B, 1)
    loss = (1.0 - y_g ** q) / q * w - (1.0 - k ** q) / q * w
    return jnp.mean(loss)


# TODO(synk): update_weight (the pruning-factor refresh) is a separate
# host-side parameter update and is not part of the forward pass; not ported.


if __name__ == "__main__":
    q_coef, k_coef = 0.7, 0.5
    dataset_size = 128

    key = jax.random.PRNGKey(0)
    k1, k2, k3, k4, k5, k6 = jax.random.split(key, 6)

    weight = jnp.ones((dataset_size, 1), dtype=jnp.float32)

    # --- case 1: small, single tile ---
    B, C = 8, 32
    logits = jax.random.normal(k1, (B, C), dtype=jnp.float32) * 2.0
    label_ids = jax.random.randint(k2, (B,), 0, C, dtype=jnp.int32)
    sample_ids = jax.random.permutation(k3, dataset_size)[:B].astype(jnp.int32)

    out = gce_loss(logits, label_ids, sample_ids, weight, q=q_coef, k=k_coef)
    out = jax.block_until_ready(out)
    ref = gce_loss_ref(logits, label_ids, sample_ids, weight, q=q_coef, k=k_coef)
    assert jnp.allclose(out, ref, atol=1e-5, rtol=1e-5), (out, ref)

    # --- case 2: exercises batch tiling, ragged-batch masking, 2-way split,
    #     and non-trivial pruning weights ---
    B2, C2 = 20, 32
    logits2 = jax.random.normal(k4, (B2, C2), dtype=jnp.float32) * 2.0
    label_ids2 = jax.random.randint(k5, (B2,), 0, C2, dtype=jnp.int32)
    sample_ids2 = jax.random.permutation(k6, dataset_size)[:B2].astype(jnp.int32)
    weight2 = weight.at[sample_ids2[::3]].set(0.0)   # some samples pruned

    out2 = gce_loss(logits2, label_ids2, sample_ids2, weight2,
                    q=q_coef, k=k_coef, block_b=8, num_splits=2)
    out2 = jax.block_until_ready(out2)
    ref2 = gce_loss_ref(logits2, label_ids2, sample_ids2, weight2,
                        q=q_coef, k=k_coef)
    assert jnp.allclose(out2, ref2, atol=1e-5, rtol=1e-5), (out2, ref2)

    print("KERNEL_OK")
</pallas_src>

<mosaic_0001>
module attributes {stable_mosaic.version = 11 : i64} {
  func.func @_gce_kernel(%arg0: i32, %arg1: i32, %arg2: memref<8x32xf32, #tpu.memory_space<vmem>>, %arg3: memref<8x2xf32, #tpu.memory_space<vmem>>, %arg4: memref<1x1x1xf32, #tpu.memory_space<vmem>>) attributes {dimension_semantics = [#tpu.dimension_semantics<parallel>, #tpu.dimension_semantics<arbitrary>], iteration_bounds = array<i64: 1, 1>, scalar_prefetch = 0 : i64, scratch_operands = 0 : i64, tpu.core_type = #tpu.core_type<tc>, window_params = [{transform_indices = @transform_0, window_bounds = array<i64: 8, 32>}, {transform_indices = @transform_1, window_bounds = array<i64: 8, 2>}, {transform_indices = @transform_2, window_bounds = array<i64: 1, 1, 1>}]} {
    %c0_i32 = arith.constant 0 : i32
    %0 = arith.cmpi eq, %arg1, %c0_i32 : i32
    %1 = arith.extui %0 : i1 to i32
    %c0_i32_0 = arith.constant 0 : i32
    %2 = arith.cmpi ne, %1, %c0_i32_0 : i32
    scf.if %2 {
      %cst_17 = arith.constant 0.000000e+00 : f32
      %38 = vector.broadcast %cst_17 : f32 to vector<1x1x1xf32>
      %c0_18 = arith.constant 0 : index
      %c0_19 = arith.constant 0 : index
      %c0_20 = arith.constant 0 : index
      %39 = vector.load %arg4[%c0_18, %c0_19, %c0_20] : memref<1x1x1xf32, #tpu.memory_space<vmem>>, vector<1x1x1xf32>
      tpu.vector_store %arg4[%c0_18, %c0_19, %c0_20], %38 {strides = array<i32>} : memref<1x1x1xf32, #tpu.memory_space<vmem>>, vector<1x1x1xf32>,
    } else {
    }
    %c0 = arith.constant 0 : index
    %c0_1 = arith.constant 0 : index
    %3 = vector.load %arg2[%c0, %c0_1] : memref<8x32xf32, #tpu.memory_space<vmem>>, vector<8x32xf32>
    %c0_2 = arith.constant 0 : index
    %c0_3 = arith.constant 0 : index
    %4 = vector.load %arg3[%c0_2, %c0_3] : memref<8x2xf32, #tpu.memory_space<vmem>>, vector<8x1xf32>
    %5 = arith.fptosi %4 : vector<8x1xf32> to vector<8x1xi32>
    %c0_4 = arith.constant 0 : index
    %c1 = arith.constant 1 : index
    %6 = vector.load %arg3[%c0_4, %c1] : memref<8x2xf32, #tpu.memory_space<vmem>>, vector<8x1xf32>
    %7 = tpu.iota {dimensions = array<i32: 1>} : vector<8x32xi32>
    %8 = vector.broadcast %5 : vector<8x1xi32> to vector<8x32xi32>
    %9 = arith.cmpi eq, %7, %8 : vector<8x32xi32>
    %cst = arith.constant dense<0xFF800000> : vector<8xf32>
    %10 = vector.multi_reduction <maximumf>, %3, %cst [1] : vector<8x32xf32> to vector<8xf32>
    %11 = vector.shape_cast %10 : vector<8xf32> to vector<8x1xf32>
    %cst_5 = arith.constant 0xFF800000 : f32
    %12 = vector.broadcast %cst_5 : f32 to vector<8x32xf32>
    %13 = arith.select %9, %3, %12 : vector<8x32xi1>, vector<8x32xf32>
    %cst_6 = arith.constant dense<0xFF800000> : vector<8xf32>
    %14 = vector.multi_reduction <maximumf>, %13, %cst_6 [1] : vector<8x32xf32> to vector<8xf32>
    %15 = vector.shape_cast %14 : vector<8xf32> to vector<8x1xf32>
    %16 = vector.broadcast %11 : vector<8x1xf32> to vector<8x32xf32>
    %17 = arith.subf %3, %16 : vector<8x32xf32>
    %18 = math.exp %17 : vector<8x32xf32>
    %cst_7 = arith.constant dense<0.000000e+00> : vector<8xf32>
    %19 = vector.multi_reduction <add>, %18, %cst_7 [1] : vector<8x32xf32> to vector<8xf32>
    %20 = vector.shape_cast %19 : vector<8xf32> to vector<8x1xf32>
    %21 = arith.subf %15, %11 : vector<8x1xf32>
    %22 = math.log %20 : vector<8x1xf32>
    %23 = arith.subf %21, %22 : vector<8x1xf32>
    %cst_8 = arith.constant 0.699999988 : f32
    %24 = vector.broadcast %cst_8 : f32 to vector<8x1xf32>
    %25 = arith.mulf %24, %23 : vector<8x1xf32>
    %26 = math.exp %25 : vector<8x1xf32>
    %cst_9 = arith.constant 0.615572214 : f32
    %27 = vector.broadcast %cst_9 : f32 to vector<8x1xf32>
    %28 = arith.subf %27, %26 : vector<8x1xf32>
    %29 = arith.mulf %28, %6 : vector<8x1xf32>
    %c0_10 = arith.constant 0 : index
    %c0_11 = arith.constant 0 : index
    %c0_12 = arith.constant 0 : index
    %30 = vector.load %arg4[%c0_10, %c0_11, %c0_12] : memref<1x1x1xf32, #tpu.memory_space<vmem>>, vector<1x1x1xf32>
    %31 = vector.shape_cast %30 : vector<1x1x1xf32> to vector<1x1xf32>
    %cst_13 = arith.constant dense<0.000000e+00> : vector<1xf32>
    %32 = vector.multi_reduction <add>, %29, %cst_13 [0] : vector<8x1xf32> to vector<1xf32>
    %33 = vector.shape_cast %32 : vector<1xf32> to vector<1x1xf32>
    %34 = arith.addf %31, %33 : vector<1x1xf32>
    %c0_14 = arith.constant 0 : index
    %c0_15 = arith.constant 0 : index
    %c0_16 = arith.constant 0 : index
    %35 = vector.load %arg4[%c0_14, %c0_15, %c0_16] : memref<1x1x1xf32, #tpu.memory_space<vmem>>, vector<1x1x1xf32>
    %36 = vector.shape_cast %35 : vector<1x1x1xf32> to vector<1x1xf32>
    %37 = vector.shape_cast %34 : vector<1x1xf32> to vector<1x1x1xf32>
    tpu.vector_store %arg4[%c0_14, %c0_15, %c0_16], %37 {strides = array<i32>} : memref<1x1x1xf32, #tpu.memory_space<vmem>>, vector<1x1x1xf32>,
    return
  }
  func.func @transform_0(%arg0: i32, %arg1: i32) -> (i32, i32) {
    %c1_i32 = arith.constant 1 : i32
    %0 = arith.muli %arg0, %c1_i32 : i32
    %1 = arith.addi %0, %arg1 : i32
    %c0_i32 = arith.constant 0 : i32
    %c0_i32_0 = arith.constant 0 : i32
    return %1, %c0_i32 : i32, i32
  }
  func.func @transform_1(%arg0: i32, %arg1: i32) -> (i32, i32) {
    %c1_i32 = arith.constant 1 : i32
    %0 = arith.muli %arg0, %c1_i32 : i32
    %1 = arith.addi %0, %arg1 : i32
    %c0_i32 = arith.constant 0 : i32
    %c0_i32_0 = arith.constant 0 : i32
    return %1, %c0_i32 : i32, i32
  }
  func.func @transform_2(%arg0: i32, %arg1: i32) -> (i32, i32, i32) {
    %c0_i32 = arith.constant 0 : i32
    %c0_i32_0 = arith.constant 0 : i32
    %c0_i32_1 = arith.constant 0 : i32
    return %arg0, %c0_i32, %c0_i32_0 : i32, i32, i32
  }
}

</mosaic_0001>

<llo_original>
// kernel: tpu_custom_call.1
$region0: #{tpu_custom_call.1}
  #allocation0 [shape = 'u32[]', space=smem, size = 0x4, offset = 0x4, fixed_abs, tag = 'smem constant byte address 0x4 - core index']
  #allocation1 [shape = 'u32[144,128]{1,0:T(1,128)}', space=vmem, size = 0x12000, scoped, tag = 'internal scratch']
  %s0 = inlined_call_operand.vmem [shape: f32[8,32], index: 0, kind: input, shape index: {}]
  %s1 = inlined_call_operand.vmem [shape: f32[8,2], index: 1, kind: input, shape index: {}]
  %s2 = inlined_call_operand.hbm [shape: f32[1,1,1], index: 2, kind: output, shape index: {}]
  %s3 = sld [smem:[#allocation0]]
  $region22: #{tpu_custom_call.1} parent=0
    _
  %s5 = ssub.s32 1, %s3
  %s6 = scalar_select 0, %s5, %s3
  $region1: #{tpu_custom_call.1} parent=0
    #allocation2 [shape = 'u8[512]{0}', space=vmem, size = 0x400, scoped, tag = 'output window, operand 0, single buffered']
    #allocation3 [shape = 's32[1]{0}', space=sflag, size = 0x4, scoped, tag = 'scoped memory for tpu_custom_call.1']
    %7 = vsyncpa [#allocation3], 0
    // Predicated region
    $region2: #{tpu_custom_call.1} parent=1 // pred_check
      _
    $region3: #{tpu_custom_call.1} parent=1 // pred_check_branch
      %9 = sbr.rel (0) target = $region5
    $region4: #{tpu_custom_call.1} parent=1 // pred_region
      %s10 = sadd.s32 0, 0
      %p11 = scmp.lt.s32.totalorder %s10, 0
      %s12 = scalar_select %p11, %s10, 0
      %s13 = smul.addr %s12, 8
      %s14 = scalar_lea.vmem %s0, %s13
      %s15 = sadd.s32 0, 0
    $region5: #{tpu_custom_call.1} parent=1 // pred_fallthru
      _
    // Predicated region
    $region6: #{tpu_custom_call.1} parent=1 // pred_check
      _
    $region7: #{tpu_custom_call.1} parent=1 // pred_check_branch
      %17 = sbr.rel (0) target = $region9
    $region8: #{tpu_custom_call.1} parent=1 // pred_region
      %s18 = sadd.s32 0, 0
      %p19 = scmp.lt.s32.totalorder %s18, 0
      %s20 = scalar_select %p19, %s18, 0
      %s21 = smul.addr %s20, 8
      %s22 = scalar_lea.vmem %s1, %s21
      %s23 = sadd.s32 0, 0
    $region9: #{tpu_custom_call.1} parent=1 // pred_fallthru
      _
    %s24 = sadd.s32 0, 0
    %p25 = scmp.lt.s32.totalorder %s24, 0
    %s26 = scalar_select %p25, %s24, 0
    %s27 = smul.addr %s26, 8
    %s28 = scalar_lea.vmem %s0, %s27
    %s29 = sadd.s32 0, 0
    %p30 = scmp.lt.s32.totalorder %s29, 0
    %s31 = scalar_select %p30, %s29, 0
    %s32 = smul.addr %s31, 8
    %s33 = scalar_lea.vmem %s1, %s32
    %s34 = sadd.s32 0, 0
    %p35 = scmp.lt.s32.totalorder %s34, 0
    %s36 = scalar_select %p35, %s34, 0
    %s37 = smul.addr %s36, 8
    %s38 = scalar_lea.vmem %s0, %s37
    %s39 = sadd.s32 0, 0
    %s40 = sadd.s32 0, 0
    %p41 = scmp.lt.s32.totalorder %s40, 0
    %s42 = scalar_select %p41, %s40, 0
    %s43 = smul.addr %s42, 8
    %s44 = scalar_lea.vmem %s1, %s43
    %s45 = sadd.s32 0, 0
    %p46 = scmp.eq.s32.totalorder 0, 0
    // Predicated region
    $region10: #{tpu_custom_call.1} parent=1 // pred_check
      %p47 = pneg %p46
    $region11: #{tpu_custom_call.1} parent=1 // pred_check_branch
      %49 = sbr.rel (%p47) target = $region13
    $region12: #{tpu_custom_call.1} parent=1 // pred_region
      %vm50 = vcmask 0
      %51 = vst.msk [vmem:[#allocation2] sm:$0x1] %vm50, 0.0
    $region13: #{tpu_custom_call.1} parent=1 // pred_fallthru
      _
    %v52 = vld [vmem:[%s38] sm:$0xff]
    %v53 = vld [vmem:[%s44] sm:$0xff]
    %v54 = vcvt.f32.s32.to.zero.pseudo %v53
    %v55 = vlaneseq
    %v56 = vand.u32 %v55, 127
    %57 = vset.pattern.permute.xlu0 0
    %58 = vperm.xlu0 %57, %v54
    %v59 = vpop.permute.xlu0 %58
    %vm60 = vcmp.eq.s32.totalorder %v56, %v59
    %vm61 = vcmask 261120
    %v62 = vsel %vm61, %v52, -inf
    %63 = vmax.xlane.f32.xlu0 %v62
    %v64 = vpop.xlane.xlu0 %63
    %v65 = vsel %vm60, %v52, -inf
    %v66 = vsel %vm61, %v65, -inf
    %67 = vmax.xlane.f32.xlu0 %v66
    %v68 = vpop.xlane.xlu0 %67
    %v69 = vsub.f32 %v52, %v64
    %v70 = vmul.f32 %v69, 1.442695
    %v71 = vpow.pop %v70
    %v72 = vsel %vm61, %v71, 0.0
    %73 = vadd.xlane.f32.xlu0 %v72
    %v74 = vpop.xlane.xlu0 %73
    %v75 = vsub.f32 %v68, %v64
    %v76 = vlog2.pop %v74
    %v77 = vmul.f32 %v76, 0.6931472
    %v78 = vsub.f32 %v75, %v77
    %v79 = vmul.f32 %v78, 0.7
    %v80 = vmul.f32 %v79, 1.442695
    %v81 = vpow.pop %v80
    %v82 = vsub.f32 0.6155722, %v81
    %v83 = vmul.f32 %v82, %v53
    %v84 = vld [vmem:[#allocation2] sm:$0x1]
    %vm85 = vcmask 15368
    %v86 = vsel %vm85, %v83, 0.0
    %v87 = vrot.slane %v86, 4
    %v88 = vadd.f32 %v86, %v87
    %v89 = vrot.slane %v88, 2
    %v90 = vadd.f32 %v88, %v89
    %v91 = vrot.slane %v90, 1
    %v92 = vadd.f32 %v90, %v91
    %v95 = vunpack.c.l.s4 1966171168
    %v96 = vunpack.c.0.s8 %v95
    %v97 = vlaneseq
    %v98 = vshrl.u32 %v97, 7
    %v99 = vsub.s32 %v96, %v98
    %v100 = vrot.slane %v92, %v99
    %v102 = vunpack.c.l.s4 1966171168
    %v103 = vunpack.c.0.s8 %v102
    %v104 = vlaneseq
    %v105 = vshrl.u32 %v104, 7
    %v106 = vsub.s32 %v103, %v105
    %v107 = vrot.slane %v100, %v106
    %108 = vrot.lane.b32.xlu0 %v107, 127
    %v109 = vpop.permute.xlu0 %108
    %v111 = vadd.f32 %v84, %v109
    %vm112 = vcmask 0
    %113 = vst.msk [vmem:[#allocation2] sm:$0x1] %vm112, %v111
    // Predicated region
    $region14: #{tpu_custom_call.1} parent=1 // pred_check
      _
    $region15: #{tpu_custom_call.1} parent=1 // pred_check_branch
      %115 = sbr.rel (0) target = $region17
    $region16: #{tpu_custom_call.1} parent=1 // pred_region
      %s117 = ssub.s32 16, 16
      %118 = vsyncadd [#allocation3], %s117
      %s120 = sshll.u32 [#allocation2], 4
      %s121 = int_to_ptr.vmem [resolvable:$true] %s120
      %123 = dma.vmem_to_hbm [thread:$0]  %s121, 16, %s2, [#allocation3]
    $region17: #{tpu_custom_call.1} parent=1 // pred_fallthru
      _
    // Predicated region
    $region18: #{tpu_custom_call.1} parent=1 // pred_check
      _
    $region19: #{tpu_custom_call.1} parent=1 // pred_check_branch
      %125 = sbr.rel (0) target = $region21
    $region20: #{tpu_custom_call.1} parent=1 // pred_region
      %126 = dma.done [#allocation3], 16
    $region21: #{tpu_custom_call.1} parent=1 // pred_fallthru
      _
    %127 = vsyncpa [#allocation3], 1

</llo_original>
